<compile_context>
chip_gen: v5e
topology: v5e:2x2
jax: 0.10.0
libtpu: 0.0.40
codegen_flags: <defaults>
</compile_context>

<pallas_src>
import math

import jax
import jax.numpy as jnp
from jax.experimental import pallas as pl
from jax.experimental.pallas import tpu as pltpu


def _round_up(x, m):
    return ((x + m - 1) // m) * m


def _fused_ensemble_kernel(x_ref, w1_ref, b1_ref, w2_ref, b2_ref, o_ref):
    # x_ref : (TN, D)      bf16 — row tile of the flattened input
    # w1_ref: (D, M*H)     bf16 — concatenated first-layer weights (resident)
    # b1_ref: (1, M*H)     f32
    # w2_ref: (M*H, M*D)   bf16 — block-diagonal second-layer weights (resident)
    # b2_ref: (1, M*D)     f32
    # o_ref : (TN, M*D)    bf16 — lane-dense output tile
    x = x_ref[...]
    h = jnp.dot(x, w1_ref[...], preferred_element_type=jnp.float32) + b1_ref[...]
    h = jnp.tanh(h).astype(w2_ref.dtype)
    y = jnp.dot(h, w2_ref[...], preferred_element_type=jnp.float32) + b2_ref[...]
    o_ref[...] = y.astype(o_ref.dtype)


def fuse_movement_weights(w1, b1, w2, b2, compute_dtype=jnp.bfloat16):
    """Precompute fused weights ONCE per weight update.

    w1: [M, D, H], b1: [M, H], w2: [M, H, D], b2: [M, D]
    (already transposed vs. PyTorch Linear so rows multiply on the left).

    Returns (W1_cat [D, M*H] bf16, b1_cat [1, M*H] f32,
             W2_blk [M*H, M*D] bf16, b2_cat [1, M*D] f32).
    """
    M, D, H = w1.shape
    # First layer: concatenate along the hidden (output) axis -> [D, M*H].
    w1_cat = jnp.transpose(w1, (1, 0, 2)).reshape(D, M * H).astype(compute_dtype)
    b1_cat = b1.reshape(1, M * H).astype(jnp.float32)
    # Second layer: block-diagonal [M*H, M*D]; block (m, m) = w2[m] ([H, D]).
    eye = jnp.eye(M, dtype=w2.dtype)
    w2_blk = jnp.einsum("mhd,mn->mhnd", w2, eye).reshape(M * H, M * D)
    w2_blk = w2_blk.astype(compute_dtype)
    b2_cat = b2.reshape(1, M * D).astype(jnp.float32)
    return w1_cat, b1_cat, w2_blk, b2_cat


def physical_pred(x, w1_cat, b1_cat, w2_blk, b2_cat, *, tn_max=4096, out_dtype=None):
    """x: [..., D] -> [..., M, D] using pre-fused ensemble weights."""
    *lead, D = x.shape
    MH = w1_cat.shape[1]
    MD = w2_blk.shape[1]
    M = MD // D
    N = int(math.prod(lead)) if lead else 1
    compute_dtype = w1_cat.dtype
    if out_dtype is None:
        out_dtype = compute_dtype

    x_flat = x.reshape(N, D).astype(compute_dtype)

    # Row tile: as large as tn_max allows, but capped so the grid has >=2 steps
    # when N permits (v7x has 2 TensorCores to shard the "parallel" axis over).
    TN = max(8, min(tn_max, _round_up(pl.cdiv(N, 2), 8)))
    grid = (pl.cdiv(N, TN),)  # ragged last block is clipped by Pallas (no padding)

    # VMEM budget: double-buffered I/O tiles + resident weights + f32 temporaries.
    dtb = jnp.dtype(compute_dtype).itemsize
    io_bytes = 2 * TN * (D + MD) * dtb            # x tile + out tile, x2 buffers
    wgt_bytes = (D * MH + MH * MD) * dtb + (MH + MD) * 4
    tmp_bytes = TN * (MH + MD) * 4                # f32 h and y intermediates
    vmem_limit = int(min(48 * 1024 * 1024,
                         max(32 * 1024 * 1024,
                             _round_up(io_bytes + 2 * wgt_bytes + tmp_bytes, 1 << 20)
                             + (4 << 20))))

    out = pl.pallas_call(
        _fused_ensemble_kernel,
        out_shape=jax.ShapeDtypeStruct((N, MD), out_dtype),
        grid_spec=pltpu.PrefetchScalarGridSpec(
            num_scalar_prefetch=0,
            grid=grid,
            in_specs=[
                pl.BlockSpec((TN, D), lambda n: (n, 0)),        # x row tile
                pl.BlockSpec((D, MH), lambda n: (0, 0)),        # W1_cat (resident)
                pl.BlockSpec((1, MH), lambda n: (0, 0)),        # b1_cat (resident)
                pl.BlockSpec((MH, MD), lambda n: (0, 0)),       # W2_blk (resident)
                pl.BlockSpec((1, MD), lambda n: (0, 0)),        # b2_cat (resident)
            ],
            out_specs=pl.BlockSpec((TN, MD), lambda n: (n, 0)),
        ),
        compiler_params=pltpu.CompilerParams(
            dimension_semantics=("parallel",),
            vmem_limit_bytes=vmem_limit,
        ),
    )(x_flat, w1_cat, b1_cat, w2_blk, b2_cat)

    return out.reshape(*lead, M, D)


def _reference(x, w1, b1, w2, b2):
    # Pure-JAX f32 reference: per-model MLP, stacked on dim=-2.
    preds = []
    for m in range(w1.shape[0]):
        h = jnp.tanh(x @ w1[m] + b1[m])
        preds.append(h @ w2[m] + b2[m])
    return jnp.stack(preds, axis=-2)


if __name__ == "__main__":
    # Small, deterministic shapes.
    B, S, D, H, M = 2, 8, 32, 64, 4  # batch, seq, feature dim, hidden, num models

    key = jax.random.PRNGKey(0)
    kx, k1, k2, k3, k4 = jax.random.split(key, 5)

    x = jax.random.normal(kx, (B, S, D), dtype=jnp.float32)
    w1 = 0.1 * jax.random.normal(k1, (M, D, H), dtype=jnp.float32)
    b1 = 0.1 * jax.random.normal(k2, (M, H), dtype=jnp.float32)
    w2 = 0.1 * jax.random.normal(k3, (M, H, D), dtype=jnp.float32)
    b2 = 0.1 * jax.random.normal(k4, (M, D), dtype=jnp.float32)

    # Weight fusion happens once (per weight update), outside the hot path.
    fused = fuse_movement_weights(w1, b1, w2, b2)

    out = physical_pred(x, *fused)
    out = jax.block_until_ready(out)

    ref = _reference(x, w1, b1, w2, b2)
    assert out.shape == (B, S, M, D), out.shape
    max_err = float(jnp.max(jnp.abs(out.astype(jnp.float32) - ref)))
    # bf16 I/O path: expect ~1e-2-level agreement with the f32 reference.
    assert max_err < 5e-2, f"max abs err {max_err} vs reference"

    print("KERNEL_OK")
</pallas_src>

<mosaic_0001>
module attributes {stable_mosaic.version = 11 : i64} {
  func.func @_fused_ensemble_kernel(%arg0: i32, %arg1: memref<8x32xbf16, #tpu.memory_space<vmem>>, %arg2: memref<32x256xbf16, #tpu.memory_space<vmem>>, %arg3: memref<1x256xf32, #tpu.memory_space<vmem>>, %arg4: memref<256x128xbf16, #tpu.memory_space<vmem>>, %arg5: memref<1x128xf32, #tpu.memory_space<vmem>>, %arg6: memref<8x128xbf16, #tpu.memory_space<vmem>>) attributes {dimension_semantics = [#tpu.dimension_semantics<parallel>], iteration_bounds = array<i64: 2>, scalar_prefetch = 0 : i64, scratch_operands = 0 : i64, tpu.core_type = #tpu.core_type<tc>, window_params = [{transform_indices = @transform_0, window_bounds = array<i64: 8, 32>}, {pipeline_mode = #tpu.pipeline_mode<synchronous>, transform_indices = @transform_1, window_bounds = array<i64: 32, 256>}, {pipeline_mode = #tpu.pipeline_mode<synchronous>, transform_indices = @transform_2, window_bounds = array<i64: 1, 256>}, {pipeline_mode = #tpu.pipeline_mode<synchronous>, transform_indices = @transform_3, window_bounds = array<i64: 256, 128>}, {pipeline_mode = #tpu.pipeline_mode<synchronous>, transform_indices = @transform_4, window_bounds = array<i64: 1, 128>}, {transform_indices = @transform_5, window_bounds = array<i64: 8, 128>}]} {
    %c0 = arith.constant 0 : index
    %c0_0 = arith.constant 0 : index
    %0 = vector.load %arg1[%c0, %c0_0] : memref<8x32xbf16, #tpu.memory_space<vmem>>, vector<8x32xbf16>
    %c0_1 = arith.constant 0 : index
    %c0_2 = arith.constant 0 : index
    %1 = vector.load %arg2[%c0_1, %c0_2] : memref<32x256xbf16, #tpu.memory_space<vmem>>, vector<32x256xbf16>
    %cst = arith.constant dense<0.000000e+00> : vector<8x256xf32>
    %2 = tpu.matmul %0, %1, %cst {dimension_numbers = #tpu.dot_dimension_numbers<[1], [0], [0], [1], [0, 0, 1, 1], [], []>} : vector<8x32xbf16>, vector<32x256xbf16>, vector<8x256xf32> -> vector<8x256xf32>
    %c0_3 = arith.constant 0 : index
    %c0_4 = arith.constant 0 : index
    %3 = vector.load %arg3[%c0_3, %c0_4] : memref<1x256xf32, #tpu.memory_space<vmem>>, vector<1x256xf32>
    %4 = vector.broadcast %3 : vector<1x256xf32> to vector<8x256xf32>
    %5 = arith.addf %2, %4 : vector<8x256xf32>
    %6 = math.tanh %5 : vector<8x256xf32>
    %7 = arith.truncf %6 : vector<8x256xf32> to vector<8x256xbf16>
    %c0_5 = arith.constant 0 : index
    %c0_6 = arith.constant 0 : index
    %8 = vector.load %arg4[%c0_5, %c0_6] : memref<256x128xbf16, #tpu.memory_space<vmem>>, vector<256x128xbf16>
    %cst_7 = arith.constant dense<0.000000e+00> : vector<8x128xf32>
    %9 = tpu.matmul %7, %8, %cst_7 {dimension_numbers = #tpu.dot_dimension_numbers<[1], [0], [0], [1], [0, 0, 1, 1], [], []>} : vector<8x256xbf16>, vector<256x128xbf16>, vector<8x128xf32> -> vector<8x128xf32>
    %c0_8 = arith.constant 0 : index
    %c0_9 = arith.constant 0 : index
    %10 = vector.load %arg5[%c0_8, %c0_9] : memref<1x128xf32, #tpu.memory_space<vmem>>, vector<1x128xf32>
    %11 = vector.broadcast %10 : vector<1x128xf32> to vector<8x128xf32>
    %12 = arith.addf %9, %11 : vector<8x128xf32>
    %13 = arith.truncf %12 : vector<8x128xf32> to vector<8x128xbf16>
    %c0_10 = arith.constant 0 : index
    %c0_11 = arith.constant 0 : index
    %14 = vector.load %arg6[%c0_10, %c0_11] : memref<8x128xbf16, #tpu.memory_space<vmem>>, vector<8x128xbf16>
    tpu.vector_store %arg6[%c0_10, %c0_11], %13 {strides = array<i32>} : memref<8x128xbf16, #tpu.memory_space<vmem>>, vector<8x128xbf16>,
    return
  }
  func.func @transform_0(%arg0: i32) -> (i32, i32) {
    %c0_i32 = arith.constant 0 : i32
    %c0_i32_0 = arith.constant 0 : i32
    return %arg0, %c0_i32 : i32, i32
  }
  func.func @transform_1(%arg0: i32) -> (i32, i32) {
    %c0_i32 = arith.constant 0 : i32
    %c0_i32_0 = arith.constant 0 : i32
    %c0_i32_1 = arith.constant 0 : i32
    return %c0_i32, %c0_i32_0 : i32, i32
  }
  func.func @transform_2(%arg0: i32) -> (i32, i32) {
    %c0_i32 = arith.constant 0 : i32
    %c0_i32_0 = arith.constant 0 : i32
    %c0_i32_1 = arith.constant 0 : i32
    return %c0_i32, %c0_i32_0 : i32, i32
  }
  func.func @transform_3(%arg0: i32) -> (i32, i32) {
    %c0_i32 = arith.constant 0 : i32
    %c0_i32_0 = arith.constant 0 : i32
    %c0_i32_1 = arith.constant 0 : i32
    return %c0_i32, %c0_i32_0 : i32, i32
  }
  func.func @transform_4(%arg0: i32) -> (i32, i32) {
    %c0_i32 = arith.constant 0 : i32
    %c0_i32_0 = arith.constant 0 : i32
    %c0_i32_1 = arith.constant 0 : i32
    return %c0_i32, %c0_i32_0 : i32, i32
  }
  func.func @transform_5(%arg0: i32) -> (i32, i32) {
    %c0_i32 = arith.constant 0 : i32
    %c0_i32_0 = arith.constant 0 : i32
    return %arg0, %c0_i32 : i32, i32
  }
}

</mosaic_0001>

<llo_original>
// kernel: tpu_custom_call.1
$region0: #{tpu_custom_call.1}
  #allocation0 [shape = 'u32[]', space=smem, size = 0x4, offset = 0x4, fixed_abs, tag = 'smem constant byte address 0x4 - core index']
  #allocation1 [shape = 'u32[72,128]{1,0:T(1,128)}', space=vmem, size = 0x9000, scoped, tag = 'internal scratch']
  %s0 = inlined_call_operand.hbm [shape: bf16[16,32], index: 0, kind: input, shape index: {}]
  %s1 = inlined_call_operand.hbm [shape: bf16[32,256], index: 1, kind: input, shape index: {}]
  %s2 = inlined_call_operand.hbm [shape: f32[1,256], index: 2, kind: input, shape index: {}]
  %s3 = inlined_call_operand.hbm [shape: bf16[256,128], index: 3, kind: input, shape index: {}]
  %s4 = inlined_call_operand.vmem [shape: f32[1,128], index: 4, kind: input, shape index: {}]
  %s5 = inlined_call_operand.hbm [shape: bf16[16,128], index: 5, kind: output, shape index: {}]
  %s6 = sld [smem:[#allocation0]]
  $region69: #{tpu_custom_call.1} parent=0
    _
  %s8 = ssub.s32 1, %s6
  %s9 = scalar_select 0, %s8, %s6
  $region1: #{tpu_custom_call.1} parent=0
    #allocation2 [shape = 'u8[4096]{0}', space=vmem, size = 0x1000, scoped, tag = 'input window, operand 0']
    #allocation3 [shape = 's32[2]{0}', space=sflag, size = 0x8, scoped, tag = 'scoped memory for tpu_custom_call.1']
    #allocation4 [shape = 's32[2]{0}', space=sflag, size = 0x8, scoped, tag = 'scoped memory for tpu_custom_call.1']
    #allocation5 [shape = 'u8[16384]{0}', space=vmem, size = 0x4000, scoped, tag = 'input window, operand 1, single buffered']
    #allocation6 [shape = 's32[1]{0}', space=sflag, size = 0x4, scoped, tag = 'scoped memory for tpu_custom_call.1']
    #allocation7 [shape = 'u8[1024]{0}', space=vmem, size = 0x400, scoped, tag = 'input window, operand 2, single buffered']
    #allocation8 [shape = 'u8[65536]{0}', space=vmem, size = 0x10000, scoped, tag = 'input window, operand 3, single buffered']
    #allocation9 [shape = 's32[1]{0}', space=sflag, size = 0x4, scoped, tag = 'scoped memory for tpu_custom_call.1']
    #allocation10 [shape = 'u8[4096]{0}', space=vmem, size = 0x1000, scoped, tag = 'output window, operand 0']
    %10 = vsyncpa [#allocation3], 0
    %s11 = scalar_lea.sflag [#allocation3], 1
    %12 = vsyncpa %s11, 0
    %13 = vsyncpa [#allocation6], 0
    %14 = vsyncpa [#allocation9], 0
    %15 = vsyncpa [#allocation4], 0
    %s16 = scalar_lea.sflag [#allocation4], 1
    %17 = vsyncpa %s16, 0
    loop: start=0, step=1, limit=4
    $region2: #{tpu_custom_call.1} parent=1 // loop_pre_header
      _
    $region3: #{tpu_custom_call.1} parent=1 // loop_header
      %s19 = sphi 0, %s23
      %p20 = scmp.ge.s32.totalorder %s19, 4
      %s29 = sphi 0, %s31
      %s32 = sphi 0, %s29
      %s33 = sphi 0, %s32
      %s49 = sphi 0, %s33
      %s53 = sphi 0, %s53
      %s55 = sphi 0, %s53
      %s56 = sphi 0, %s55
      %s70 = sphi 0, %s56
      %s74 = sphi 0, %s74
      %s76 = sphi 0, %s74
      %s77 = sphi 0, %s76
      %s91 = sphi 0, %s77
      %s95 = sphi 0, %s95
      %s97 = sphi 0, %s95
      %s98 = sphi 0, %s97
      %s112 = sphi 0, %s98
      %s116 = sphi 0, %s116
      %s118 = sphi 0, %s116
      %s119 = sphi 0, %s118
      %s133 = sphi 0, %s119
      %s139 = sphi 0, %s141
      %s142 = sphi 0, %s139
      %s143 = sphi 0, %s142
      %s159 = sphi 0, %s143
    $region4: #{tpu_custom_call.1} parent=1 // loop_header_branch
      %22 = sbr.rel (%p20) target = $region8
    $region5: #{tpu_custom_call.1} parent=1 // loop_body
      %s24 = ssub.s32 %s19, 1
      %s25 = ssub.s32 %s19, 2
      %s26 = sadd.s32 %s19, 1
      %s27 = ssub.s32 %s19, %s26
      %p28 = scmp.eq.s32.totalorder %s27, 0
      %s30 = sadd.s32 %s29, 1
      %s31 = scalar_select %p28, %s29, %s30
      %p34 = pneg %p28
      %p35 = scmp.eq.s32.totalorder %s19, 1
      %p36 = por %p34, %p35
      %p37 = scmp.ne.s32.totalorder %s29, %s32
      %p38 = scmp.eq.s32.totalorder %s19, 0
      %p39 = por %p37, %p38
      %p40 = scmp.ne.s32.totalorder %s29, %s32
      %p41 = scmp.eq.s32.totalorder %s24, 1
      %p42 = por %p40, %p41
      %p43 = scmp.ne.s32.totalorder %s32, %s33
      %p44 = scmp.eq.s32.totalorder %s24, 0
      %p45 = por %p43, %p44
      %p46 = scmp.ne.s32.totalorder %s32, %s33
      %p47 = scmp.eq.s32.totalorder %s25, 1
      %p48 = por %p46, %p47
      %p50 = scmp.ne.s32.totalorder %s33, %s49
      %p51 = scmp.eq.s32.totalorder %s25, 0
      %p52 = por %p50, %p51
      %s54 = sadd.s32 %s53, 1
      %p57 = scmp.eq.s32.totalorder %s19, 1
      %p58 = scmp.ne.s32.totalorder %s53, %s55
      %p59 = scmp.eq.s32.totalorder %s19, 0
      %p60 = por %p58, %p59
      %p61 = scmp.ne.s32.totalorder %s53, %s55
      %p62 = scmp.eq.s32.totalorder %s24, 1
      %p63 = por %p61, %p62
      %p64 = scmp.ne.s32.totalorder %s55, %s56
      %p65 = scmp.eq.s32.totalorder %s24, 0
      %p66 = por %p64, %p65
      %p67 = scmp.ne.s32.totalorder %s55, %s56
      %p68 = scmp.eq.s32.totalorder %s25, 1
      %p69 = por %p67, %p68
      %p71 = scmp.ne.s32.totalorder %s56, %s70
      %p72 = scmp.eq.s32.totalorder %s25, 0
      %p73 = por %p71, %p72
      %s75 = sadd.s32 %s74, 1
      %p78 = scmp.eq.s32.totalorder %s19, 1
      %p79 = scmp.ne.s32.totalorder %s74, %s76
      %p80 = scmp.eq.s32.totalorder %s19, 0
      %p81 = por %p79, %p80
      %p82 = scmp.ne.s32.totalorder %s74, %s76
      %p83 = scmp.eq.s32.totalorder %s24, 1
      %p84 = por %p82, %p83
      %p85 = scmp.ne.s32.totalorder %s76, %s77
      %p86 = scmp.eq.s32.totalorder %s24, 0
      %p87 = por %p85, %p86
      %p88 = scmp.ne.s32.totalorder %s76, %s77
      %p89 = scmp.eq.s32.totalorder %s25, 1
      %p90 = por %p88, %p89
      %p92 = scmp.ne.s32.totalorder %s77, %s91
      %p93 = scmp.eq.s32.totalorder %s25, 0
      %p94 = por %p92, %p93
      %s96 = sadd.s32 %s95, 1
      %p99 = scmp.eq.s32.totalorder %s19, 1
      %p100 = scmp.ne.s32.totalorder %s95, %s97
      %p101 = scmp.eq.s32.totalorder %s19, 0
      %p102 = por %p100, %p101
      %p103 = scmp.ne.s32.totalorder %s95, %s97
      %p104 = scmp.eq.s32.totalorder %s24, 1
      %p105 = por %p103, %p104
      %p106 = scmp.ne.s32.totalorder %s97, %s98
      %p107 = scmp.eq.s32.totalorder %s24, 0
      %p108 = por %p106, %p107
      %p109 = scmp.ne.s32.totalorder %s97, %s98
      %p110 = scmp.eq.s32.totalorder %s25, 1
      %p111 = por %p109, %p110
      %p113 = scmp.ne.s32.totalorder %s98, %s112
      %p114 = scmp.eq.s32.totalorder %s25, 0
      %p115 = por %p113, %p114
      %s117 = sadd.s32 %s116, 1
      %p120 = scmp.eq.s32.totalorder %s19, 1
      %p121 = scmp.ne.s32.totalorder %s116, %s118
      %p122 = scmp.eq.s32.totalorder %s19, 0
      %p123 = por %p121, %p122
      %p124 = scmp.ne.s32.totalorder %s116, %s118
      %p125 = scmp.eq.s32.totalorder %s24, 1
      %p126 = por %p124, %p125
      %p127 = scmp.ne.s32.totalorder %s118, %s119
      %p128 = scmp.eq.s32.totalorder %s24, 0
      %p129 = por %p127, %p128
      %p130 = scmp.ne.s32.totalorder %s118, %s119
      %p131 = scmp.eq.s32.totalorder %s25, 1
      %p132 = por %p130, %p131
      %p134 = scmp.ne.s32.totalorder %s119, %s133
      %p135 = scmp.eq.s32.totalorder %s25, 0
      %p136 = por %p134, %p135
      %s137 = ssub.s32 %s19, %s26
      %p138 = scmp.eq.s32.totalorder %s137, 0
      %s140 = sadd.s32 %s139, 1
      %s141 = scalar_select %p138, %s139, %s140
      %p144 = pneg %p138
      %p145 = scmp.eq.s32.totalorder %s19, 1
      %p146 = por %p144, %p145
      %p147 = scmp.ne.s32.totalorder %s139, %s142
      %p148 = scmp.eq.s32.totalorder %s19, 0
      %p149 = por %p147, %p148
      %p150 = scmp.ne.s32.totalorder %s139, %s142
      %p151 = scmp.eq.s32.totalorder %s24, 1
      %p152 = por %p150, %p151
      %p153 = scmp.ne.s32.totalorder %s142, %s143
      %p154 = scmp.eq.s32.totalorder %s24, 0
      %p155 = por %p153, %p154
      %p156 = scmp.ne.s32.totalorder %s142, %s143
      %p157 = scmp.eq.s32.totalorder %s25, 1
      %p158 = por %p156, %p157
      %p160 = scmp.ne.s32.totalorder %s143, %s159
      %p161 = scmp.eq.s32.totalorder %s25, 0
      %p162 = por %p160, %p161
      %p163 = scmp.le.s32.totalorder 1, %s19
      %p164 = scmp.lt.s32.totalorder %s19, 3
      %p165 = pnand %p163, %p164
      %p166 = pneg %p165
      // Predicated region
      $region9: #{tpu_custom_call.1} parent=5 // pred_check
        _
      $region10: #{tpu_custom_call.1} parent=5 // pred_check_branch
        %168 = sbr.rel (%p165) target = $region12
      $region11: #{tpu_custom_call.1} parent=5 // pred_region
        %s169 = ssub.s32 %s19, 1
        // Predicated region
        $region13: #{tpu_custom_call.1} parent=11 // pred_check
          %p170 = pneg %p66
        $region14: #{tpu_custom_call.1} parent=11 // pred_check_branch
          %172 = sbr.rel (%p170) target = $region16
        $region15: #{tpu_custom_call.1} parent=11 // pred_region
          %174 = vsyncadd [#allocation6], 0
          %s175 = sshll.u32 %s1, 4
          %s176 = int_to_ptr.hbm [resolvable:$true] %s175
          %s177 = sshll.u32 [#allocation5], 4
          %s178 = int_to_ptr.vmem [resolvable:$true] %s177
          %183 = dma.hbm_to_vmem [thread:$0]  %s176, 512, %s178, [#allocation6], 128, 128, 8
        $region16: #{tpu_custom_call.1} parent=11 // pred_fallthru
          _
        // Predicated region
        $region17: #{tpu_custom_call.1} parent=11 // pred_check
          %p184 = pneg %p87
        $region18: #{tpu_custom_call.1} parent=11 // pred_check_branch
          %186 = sbr.rel (%p184) target = $region20
        $region19: #{tpu_custom_call.1} parent=11 // pred_region
          %188 = vsyncadd [#allocation6], 0
          %s190 = sshll.u32 %s2, 4
          %s191 = int_to_ptr.hbm [resolvable:$true] %s190
          %s192 = sshll.u32 [#allocation7], 4
          %s193 = int_to_ptr.vmem [resolvable:$true] %s192
          %195 = dma.hbm_to_vmem [thread:$0]  %s191, 32, %s193, [#allocation6]
        $region20: #{tpu_custom_call.1} parent=11 // pred_fallthru
          _
        // Predicated region
        $region21: #{tpu_custom_call.1} parent=11 // pred_check
          %p196 = pneg %p108
        $region22: #{tpu_custom_call.1} parent=11 // pred_check_branch
          %198 = sbr.rel (%p196) target = $region24
        $region23: #{tpu_custom_call.1} parent=11 // pred_region
          %200 = vsyncadd [#allocation9], 0
          %s201 = sshll.u32 %s3, 4
          %s202 = int_to_ptr.hbm [resolvable:$true] %s201
          %s203 = sshll.u32 [#allocation8], 4
          %s204 = int_to_ptr.vmem [resolvable:$true] %s203
          %209 = dma.hbm_to_vmem [thread:$0]  %s202, 2048, %s204, [#allocation9], 64, 64, 4
        $region24: #{tpu_custom_call.1} parent=11 // pred_fallthru
          _
        // Predicated region
        $region25: #{tpu_custom_call.1} parent=11 // pred_check
          %p210 = pneg %p129
        $region26: #{tpu_custom_call.1} parent=11 // pred_check_branch
          %212 = sbr.rel (%p210) target = $region28
        $region27: #{tpu_custom_call.1} parent=11 // pred_region
          _
        $region28: #{tpu_custom_call.1} parent=11 // pred_fallthru
          _
      $region12: #{tpu_custom_call.1} parent=5 // pred_fallthru
        _
      %p213 = scmp.lt.s32.totalorder %s19, 2
      // Predicated region
      $region29: #{tpu_custom_call.1} parent=5 // pred_check
        %p214 = pneg %p213
      $region30: #{tpu_custom_call.1} parent=5 // pred_check_branch
        %216 = sbr.rel (%p214) target = $region32
      $region31: #{tpu_custom_call.1} parent=5 // pred_region
        // Predicated region
        $region33: #{tpu_custom_call.1} parent=31 // pred_check
          %p217 = pneg %p39
        $region34: #{tpu_custom_call.1} parent=31 // pred_check_branch
          %219 = sbr.rel (%p217) target = $region36
        $region35: #{tpu_custom_call.1} parent=31 // pred_region
          %s220 = sand.u32 %s29, 1
          %s221 = scalar_lea.sflag [#allocation3], %s220
          %s222 = sand.u32 %s29, 1
          %s223 = smul.addr %s222, 4
          %s224 = scalar_lea.vmem [#allocation2], %s223
          %226 = vsyncadd %s221, 0
          %s227 = smul.addr %s19, 4
          %s228 = scalar_lea.hbm %s0, %s227
          %s230 = sshll.u32 %s228, 4
          %s231 = int_to_ptr.hbm [resolvable:$true] %s230
          %s232 = sshll.u32 %s224, 4
          %s233 = int_to_ptr.vmem [resolvable:$true] %s232
          %235 = dma.hbm_to_vmem [thread:$0]  %s231, 64, %s233, %s221
        $region36: #{tpu_custom_call.1} parent=31 // pred_fallthru
          _
      $region32: #{tpu_custom_call.1} parent=5 // pred_fallthru
        _
      %p236 = scmp.le.s32.totalorder 1, %s19
      %p237 = scmp.lt.s32.totalorder %s19, 3
      %p238 = pnand %p236, %p237
      %p239 = pneg %p238
      // Predicated region
      $region37: #{tpu_custom_call.1} parent=5 // pred_check
        _
      $region38: #{tpu_custom_call.1} parent=5 // pred_check_branch
        %241 = sbr.rel (%p238) target = $region40
      $region39: #{tpu_custom_call.1} parent=5 // pred_region
        %s242 = ssub.s32 %s19, 1
        %s243 = sand.u32 %s32, 1
        %s244 = scalar_lea.sflag [#allocation3], %s243
        %s245 = sand.u32 %s32, 1
        %s246 = smul.addr %s245, 4
        %s247 = scalar_lea.vmem [#allocation2], %s246
        // Predicated region
        $region41: #{tpu_custom_call.1} parent=39 // pred_check
          %p248 = pneg %p45
        $region42: #{tpu_custom_call.1} parent=39 // pred_check_branch
          %250 = sbr.rel (%p248) target = $region44
        $region43: #{tpu_custom_call.1} parent=39 // pred_region
          %252 = dma.done %s244, 64
        $region44: #{tpu_custom_call.1} parent=39 // pred_fallthru
          _
        // Predicated region
        $region45: #{tpu_custom_call.1} parent=39 // pred_check
          %p253 = pneg %p66
        $region46: #{tpu_custom_call.1} parent=39 // pred_check_branch
          %255 = sbr.rel (%p253) target = $region48
        $region47: #{tpu_custom_call.1} parent=39 // pred_region
          %257 = dma.done [#allocation6], 512
        $region48: #{tpu_custom_call.1} parent=39 // pred_fallthru
          _
        // Predicated region
        $region49: #{tpu_custom_call.1} parent=39 // pred_check
          %p258 = pneg %p87
        $region50: #{tpu_custom_call.1} parent=39 // pred_check_branch
          %260 = sbr.rel (%p258) target = $region52
        $region51: #{tpu_custom_call.1} parent=39 // pred_region
          %262 = dma.done [#allocation6], 32
        $region52: #{tpu_custom_call.1} parent=39 // pred_fallthru
          _
        // Predicated region
        $region53: #{tpu_custom_call.1} parent=39 // pred_check
          %p263 = pneg %p108
        $region54: #{tpu_custom_call.1} parent=39 // pred_check_branch
          %265 = sbr.rel (%p263) target = $region56
        $region55: #{tpu_custom_call.1} parent=39 // pred_region
          %267 = dma.done [#allocation9], 2048
        $region56: #{tpu_custom_call.1} parent=39 // pred_fallthru
          _
        %s268 = sand.u32 %s32, 1
        %s269 = scalar_lea.sflag [#allocation3], %s268
        %s270 = sand.u32 %s32, 1
        %s271 = smul.addr %s270, 4
        %s272 = scalar_lea.vmem [#allocation2], %s271
        %p273 = pneg %p45
        %p274 = pneg %p42
        %p275 = pneg %p66
        %p276 = pneg %p63
        %p277 = pneg %p87
        %p278 = pneg %p84
        %p279 = pneg %p108
        %p280 = pneg %p105
        %p281 = pneg %p129
        %p282 = pneg %p126
        %p283 = pneg %p155
        %p284 = pneg %p152
        %s285 = sand.u32 %s142, 1
        %s286 = scalar_lea.sflag [#allocation4], %s285
        %s287 = sand.u32 %s142, 1
        %s288 = smul.addr %s287, 4
        %s289 = scalar_lea.vmem [#allocation10], %s288
        %v291 = vld [vmem:[%s247] sm:$0xf]
        %v292 = vld [vmem:[#allocation5] sm:$0xff]
        %v293 = vld [vmem:[#allocation5 + $0x8] sm:$0xff]
        %v294 = vld [vmem:[#allocation5 + $0x10] sm:$0xff]
        %v295 = vld [vmem:[#allocation5 + $0x18] sm:$0xff]
        %v296 = vld [vmem:[#allocation7] sm:$0x3]
        %v298 = vperm.slane %v296, 0
        %v299 = vperm.slane %v296, 1
        %v306 = vunpack.c.l.b16 %v292
        %v307 = vunpack.c.h.b16 %v292
        %v308 = vunpack.c.l.b16 %v293
        %v309 = vunpack.c.h.b16 %v293
        %v310 = vunpack.c.l.b16 %v294
        %v311 = vunpack.c.h.b16 %v294
        %v312 = vunpack.c.l.b16 %v295
        %v313 = vunpack.c.h.b16 %v295
        %v314 = vpack.c.b16 %v308, %v306
        %v315 = vpack.c.b16 %v309, %v307
        %v316 = vpack.c.b16 %v312, %v310
        %v317 = vpack.c.b16 %v313, %v311
        %vm322 = vcmask 261120
        %v324 = vsel %vm322, %v291, 0
        %326 = vmatpush.bf16.msra.mxu0 0
        %327 = vmatpush.bf16.msra.mxu0 0
        %328 = vmatpush.bf16.msra.mxu0 0
        %329 = vmatpush.bf16.msra.mxu0 0
        %330 = vmatpush.bf16.msra.mxu0 0
        %331 = vmatpush.bf16.msra.mxu0 0
        %332 = vmatpush.bf16.msra.mxu0 %v316
        %333 = vmatpush.bf16.msra.mxu0 %v314
        %334 = vmatmul.bf16.gmra.mxu0 %v324
        %v335 = vpop.f32.mrf.mxu0
        %v336 = vadd.f32 %v298, %v335
        %v337 = vpop.f32.mrf.mxu0
        %338 = vdwg.mxu0
        %339 = vmatpush.bf16.msra.mxu0 0
        %340 = vmatpush.bf16.msra.mxu0 0
        %341 = vmatpush.bf16.msra.mxu0 0
        %342 = vmatpush.bf16.msra.mxu0 0
        %343 = vmatpush.bf16.msra.mxu0 0
        %344 = vmatpush.bf16.msra.mxu0 0
        %345 = vmatpush.bf16.msra.mxu0 %v317
        %346 = vmatpush.bf16.msra.mxu0 %v315
        %347 = vmatmul.bf16.gmra.mxu0 %v324
        %v348 = vpop.f32.mrf.mxu0
        %v349 = vadd.f32 %v299, %v348
        %v350 = vpop.f32.mrf.mxu0
        %351 = vdwg.mxu0
        %v352 = vtanh.pop %v336
        %v353 = vtanh.pop %v349
        %v354 = vpack.c.bf16 %v352, %v352
        %v355 = vpack.c.bf16 %v353, %v353
        %v356 = vld [vmem:[#allocation8] sm:$0xf]
        %v357 = vld [vmem:[#allocation8 + $0x4] sm:$0xf]
        %v358 = vld [vmem:[#allocation8 + $0x8] sm:$0xf]
        %v359 = vld [vmem:[#allocation8 + $0xc] sm:$0xf]
        %v360 = vld [vmem:[#allocation8 + $0x10] sm:$0xf]
        %v361 = vld [vmem:[#allocation8 + $0x14] sm:$0xf]
        %v362 = vld [vmem:[#allocation8 + $0x18] sm:$0xf]
        %v363 = vld [vmem:[#allocation8 + $0x1c] sm:$0xf]
        %v364 = vld [vmem:[#allocation8 + $0x20] sm:$0xf]
        %v365 = vld [vmem:[#allocation8 + $0x24] sm:$0xf]
        %v366 = vld [vmem:[#allocation8 + $0x28] sm:$0xf]
        %v367 = vld [vmem:[#allocation8 + $0x2c] sm:$0xf]
        %v368 = vld [vmem:[#allocation8 + $0x30] sm:$0xf]
        %v369 = vld [vmem:[#allocation8 + $0x34] sm:$0xf]
        %v370 = vld [vmem:[#allocation8 + $0x38] sm:$0xf]
        %v371 = vld [vmem:[#allocation8 + $0x3c] sm:$0xf]
        %v372 = vld [vmem:[#allocation8 + $0x40] sm:$0xf]
        %v373 = vld [vmem:[#allocation8 + $0x44] sm:$0xf]
        %v374 = vld [vmem:[#allocation8 + $0x48] sm:$0xf]
        %v375 = vld [vmem:[#allocation8 + $0x4c] sm:$0xf]
        %v376 = vld [vmem:[#allocation8 + $0x50] sm:$0xf]
        %v377 = vld [vmem:[#allocation8 + $0x54] sm:$0xf]
        %v378 = vld [vmem:[#allocation8 + $0x58] sm:$0xf]
        %v379 = vld [vmem:[#allocation8 + $0x5c] sm:$0xf]
        %v380 = vld [vmem:[#allocation8 + $0x60] sm:$0xf]
        %v381 = vld [vmem:[#allocation8 + $0x64] sm:$0xf]
        %v382 = vld [vmem:[#allocation8 + $0x68] sm:$0xf]
        %v383 = vld [vmem:[#allocation8 + $0x6c] sm:$0xf]
        %v384 = vld [vmem:[#allocation8 + $0x70] sm:$0xf]
        %v385 = vld [vmem:[#allocation8 + $0x74] sm:$0xf]
        %v386 = vld [vmem:[#allocation8 + $0x78] sm:$0xf]
        %v387 = vld [vmem:[#allocation8 + $0x7c] sm:$0xf]
        %v388 = vld [vmem:[%s4] sm:$0x1]
        %v390 = vperm.slane %v388, 0
        %v424 = vunpack.c.l.b16 %v356
        %v425 = vunpack.c.l.b16 %v357
        %v426 = vunpack.c.l.b16 %v358
        %v427 = vunpack.c.l.b16 %v359
        %v428 = vunpack.c.l.b16 %v360
        %v429 = vunpack.c.l.b16 %v361
        %v430 = vunpack.c.l.b16 %v362
        %v431 = vunpack.c.l.b16 %v363
        %v432 = vunpack.c.l.b16 %v364
        %v433 = vunpack.c.l.b16 %v365
        %v434 = vunpack.c.l.b16 %v366
        %v435 = vunpack.c.l.b16 %v367
        %v436 = vunpack.c.l.b16 %v368
        %v437 = vunpack.c.l.b16 %v369
        %v438 = vunpack.c.l.b16 %v370
        %v439 = vunpack.c.l.b16 %v371
        %v440 = vunpack.c.l.b16 %v372
        %v441 = vunpack.c.l.b16 %v373
        %v442 = vunpack.c.l.b16 %v374
        %v443 = vunpack.c.l.b16 %v375
        %v444 = vunpack.c.l.b16 %v376
        %v445 = vunpack.c.l.b16 %v377
        %v446 = vunpack.c.l.b16 %v378
        %v447 = vunpack.c.l.b16 %v379
        %v448 = vunpack.c.l.b16 %v380
        %v449 = vunpack.c.l.b16 %v381
        %v450 = vunpack.c.l.b16 %v382
        %v451 = vunpack.c.l.b16 %v383
        %v452 = vunpack.c.l.b16 %v384
        %v453 = vunpack.c.l.b16 %v385
        %v454 = vunpack.c.l.b16 %v386
        %v455 = vunpack.c.l.b16 %v387
        %v456 = vpack.c.b16 %v425, %v424
        %v457 = vpack.c.b16 %v427, %v426
        %v458 = vpack.c.b16 %v429, %v428
        %v459 = vpack.c.b16 %v431, %v430
        %v460 = vpack.c.b16 %v433, %v432
        %v461 = vpack.c.b16 %v435, %v434
        %v462 = vpack.c.b16 %v437, %v436
        %v463 = vpack.c.b16 %v439, %v438
        %v464 = vpack.c.b16 %v441, %v440
        %v465 = vpack.c.b16 %v443, %v442
        %v466 = vpack.c.b16 %v445, %v444
        %v467 = vpack.c.b16 %v447, %v446
        %v468 = vpack.c.b16 %v449, %v448
        %v469 = vpack.c.b16 %v451, %v450
        %v470 = vpack.c.b16 %v453, %v452
        %v471 = vpack.c.b16 %v455, %v454
        %488 = vmatpush.bf16.msra.mxu0 %v463
        %489 = vmatpush.bf16.msra.mxu0 %v462
        %490 = vmatpush.bf16.msra.mxu0 %v461
        %491 = vmatpush.bf16.msra.mxu0 %v460
        %492 = vmatpush.bf16.msra.mxu0 %v459
        %493 = vmatpush.bf16.msra.mxu0 %v458
        %494 = vmatpush.bf16.msra.mxu0 %v457
        %495 = vmatpush.bf16.msra.mxu0 %v456
        %496 = vmatmul.bf16.gmra.mxu0 %v354
        %v497 = vpop.f32.mrf.mxu0
        %v498 = vadd.f32 %v390, %v497
        %v499 = vpop.f32.mrf.mxu0
        %500 = vdwg.mxu0
        %501 = vmatpush.bf16.msra.mxu0 %v471
        %502 = vmatpush.bf16.msra.mxu0 %v470
        %503 = vmatpush.bf16.msra.mxu0 %v469
        %504 = vmatpush.bf16.msra.mxu0 %v468
        %505 = vmatpush.bf16.msra.mxu0 %v467
        %506 = vmatpush.bf16.msra.mxu0 %v466
        %507 = vmatpush.bf16.msra.mxu0 %v465
        %508 = vmatpush.bf16.msra.mxu0 %v464
        %509 = vmatmul.bf16.gmra.mxu0 %v355
        %v510 = vpop.f32.mrf.mxu0
        %v511 = vadd.f32 %v498, %v510
        %v512 = vpop.f32.mrf.mxu0
        %513 = vdwg.mxu0
        %v514 = vpack.c.bf16 %v511, %v511
        %515 = vst [vmem:[%s289] sm:$0xf] %v514
        %s516 = sand.u32 %s142, 1
        %s517 = scalar_lea.sflag [#allocation4], %s516
        %s518 = sand.u32 %s142, 1
        %s519 = smul.addr %s518, 4
        %s520 = scalar_lea.vmem [#allocation10], %s519
        // Predicated region
        $region57: #{tpu_custom_call.1} parent=39 // pred_check
          %p521 = pneg %p152
        $region58: #{tpu_custom_call.1} parent=39 // pred_check_branch
          %523 = sbr.rel (%p521) target = $region60
        $region59: #{tpu_custom_call.1} parent=39 // pred_region
          %525 = vsyncadd %s517, 0
          %s526 = smul.addr %s24, 4
          %s527 = scalar_lea.hbm %s5, %s526
          %s529 = sshll.u32 %s520, 4
          %s530 = int_to_ptr.vmem [resolvable:$true] %s529
          %s531 = sshll.u32 %s527, 4
          %s532 = int_to_ptr.hbm [resolvable:$true] %s531
          %534 = dma.vmem_to_hbm [thread:$0]  %s530, 64, %s532, %s517
        $region60: #{tpu_custom_call.1} parent=39 // pred_fallthru
          _
      $region40: #{tpu_custom_call.1} parent=5 // pred_fallthru
        _
      %p535 = scmp.le.s32.totalorder 2, %s19
      // Predicated region
      $region61: #{tpu_custom_call.1} parent=5 // pred_check
        %p536 = pneg %p535
      $region62: #{tpu_custom_call.1} parent=5 // pred_check_branch
        %538 = sbr.rel (%p536) target = $region64
      $region63: #{tpu_custom_call.1} parent=5 // pred_region
        %s539 = ssub.s32 %s19, 2
        // Predicated region
        $region65: #{tpu_custom_call.1} parent=63 // pred_check
          %p540 = pneg %p158
        $region66: #{tpu_custom_call.1} parent=63 // pred_check_branch
          %542 = sbr.rel (%p540) target = $region68
        $region67: #{tpu_custom_call.1} parent=63 // pred_region
          %s543 = sand.u32 %s143, 1
          %s544 = scalar_lea.sflag [#allocation4], %s543
          %s545 = sand.u32 %s143, 1
          %s546 = smul.addr %s545, 4
          %s547 = scalar_lea.vmem [#allocation10], %s546
          %549 = dma.done %s544, 64
        $region68: #{tpu_custom_call.1} parent=63 // pred_fallthru
          _
      $region64: #{tpu_custom_call.1} parent=5 // pred_fallthru
        _
    $region6: #{tpu_custom_call.1} parent=1 // loop_footer
      %s23 = sadd.s32 1, %s19
    $region7: #{tpu_custom_call.1} parent=1 // loop_footer_branch
      %18 = sbr.rel target = $region3
    $region8: #{tpu_custom_call.1} parent=1 // loop_exit
      _
    %550 = vsyncpa [#allocation3], 1
    %s551 = scalar_lea.sflag [#allocation3], 1
    %552 = vsyncpa %s551, 1
    %553 = vsyncpa [#allocation6], 1
    %554 = vsyncpa [#allocation9], 1
    %555 = vsyncpa [#allocation4], 1
    %s556 = scalar_lea.sflag [#allocation4], 1
    %557 = vsyncpa %s556, 1

</llo_original>
